<compile_context>
chip_gen: v6e
topology: v6e:2x2x1
jax: 0.10.0
libtpu: 0.0.40
codegen_flags: <defaults>
</compile_context>

<pallas_src>
import jax
import jax.numpy as jnp
from jax.experimental import pallas as pl
from jax.experimental.pallas import tpu as pltpu

IN, HID, OUT = 20, 256, 10
IN_PAD = 128          # MXU-aligned K for the first matmul (weights only; x stays unpadded in HBM)
OUT_PAD = 128         # MXU-aligned N for the second matmul (weights only; output stays unpadded)
MAX_TILE_B = 2048     # rows per grid step; tiles + f32 intermediates ~5-6 MiB VMEM


def _round_up(n, m):
    return ((n + m - 1) // m) * m


def _pick_tile_b(B):
    # >= 2 balanced, sublane-aligned grid steps whenever possible (v7x megacore),
    # capped so everything stays well under the v5e 16 MiB scoped-VMEM default.
    if B <= 8:
        return B                      # single block; block dim == full array dim
    return min(MAX_TILE_B, _round_up(pl.cdiv(B, 2), 8))


def mlp_kernel(x_ref, w1_ref, b1_ref, w2_ref, b2_ref, o_ref, xp_ref):
    # Zero-pad x from 20 -> 128 lanes inside the kernel (VPU/store slack is huge
    # under the DMA); keeps all padding off the HBM streams.
    xp_ref[...] = jnp.zeros_like(xp_ref)
    xp_ref[:, :IN] = x_ref[...]
    # hidden layer: (tile_b,128)bf16 @ (128,256)bf16 -> f32 accumulate on the MXU
    h = jnp.dot(xp_ref[...].astype(jnp.bfloat16), w1_ref[...],
                preferred_element_type=jnp.float32)
    # bias + ReLU epilogue in f32 on the VPU (v5e has no bf16 VPU)
    h = jnp.maximum(h + b1_ref[...], 0.0)
    # output layer: (tile_b,256)bf16 @ (256,128)bf16 -> f32; only 10 columns useful
    y = jnp.dot(h.astype(jnp.bfloat16), w2_ref[...],
                preferred_element_type=jnp.float32)
    # unpadded (tile_b, 10) f32 store: masked vst, but HBM is the bottleneck
    o_ref[...] = (y[:, :OUT] + b2_ref[...]).astype(o_ref.dtype)


@jax.jit
def mlp_forward(x, w1_p, b1_p, w2_p, b2_p):
    """x: (B, 20) f32; params from prepare_params()."""
    B = x.shape[0]
    tile_b = _pick_tile_b(B)
    grid = (pl.cdiv(B, tile_b),)   # ragged last block: rows independent, OOB writes masked

    flops = 2 * B * (IN * HID + HID * OUT)
    bytes_accessed = (B * IN * 4 + B * OUT * 4
                      + w1_p.size * 2 + w2_p.size * 2
                      + b1_p.size * 4 + b2_p.size * 4)

    return pl.pallas_call(
        mlp_kernel,
        out_shape=jax.ShapeDtypeStruct((B, OUT), jnp.float32),
        grid=grid,
        in_specs=[
            pl.BlockSpec((tile_b, IN), lambda i: (i, 0)),     # x: streamed, unpadded
            pl.BlockSpec((IN_PAD, HID), lambda i: (0, 0)),    # w1: VMEM-resident
            pl.BlockSpec((1, HID), lambda i: (0, 0)),         # b1: resident
            pl.BlockSpec((HID, OUT_PAD), lambda i: (0, 0)),   # w2: resident
            pl.BlockSpec((1, OUT), lambda i: (0, 0)),         # b2: resident
        ],
        out_specs=pl.BlockSpec((tile_b, OUT), lambda i: (i, 0)),
        scratch_shapes=[pltpu.VMEM((tile_b, IN_PAD), jnp.float32)],
        compiler_params=pltpu.CompilerParams(
            dimension_semantics=("parallel",)),
        cost_estimate=pl.CostEstimate(
            flops=flops, transcendentals=0, bytes_accessed=bytes_accessed),
    )(x, w1_p, b1_p, w2_p, b2_p)


def prepare_params(w1, b1, w2, b2):
    """One-time layout plumbing: bf16 weights zero-padded to MXU-aligned shapes."""
    w1_p = jnp.zeros((IN_PAD, HID), jnp.bfloat16).at[:IN, :].set(w1.astype(jnp.bfloat16))
    b1_p = b1.reshape(1, HID).astype(jnp.float32)
    w2_p = jnp.zeros((HID, OUT_PAD), jnp.bfloat16).at[:, :OUT].set(w2.astype(jnp.bfloat16))
    b2_p = b2.reshape(1, OUT).astype(jnp.float32)
    return w1_p, b1_p, w2_p, b2_p


def init_params(key):
    # Deterministic synthetic init (shapes match nn.Linear(20,256), nn.Linear(256,10)).
    k1, k2, k3, k4 = jax.random.split(key, 4)
    # PyTorch layout (OUT, IN); transpose once to kernel layout (IN, OUT).
    w1_pt = jax.random.uniform(k1, (HID, IN), jnp.float32, -0.1, 0.1)
    b1_pt = jax.random.uniform(k2, (HID,), jnp.float32, -0.1, 0.1)
    w2_pt = jax.random.uniform(k3, (OUT, HID), jnp.float32, -0.1, 0.1)
    b2_pt = jax.random.uniform(k4, (OUT,), jnp.float32, -0.1, 0.1)
    return w1_pt.T, b1_pt, w2_pt.T, b2_pt   # (IN,HID), (HID,), (HID,OUT), (OUT,)


def _ref(x, w1, b1, w2, b2):
    return jnp.maximum(x @ w1 + b1, 0.0) @ w2 + b2


if __name__ == "__main__":
    key = jax.random.PRNGKey(0)
    kx, kp = jax.random.split(key)
    w1, b1, w2, b2 = init_params(kp)
    params = prepare_params(w1, b1, w2, b2)

    # Spec-sized input: matches torch.rand(2, 20)
    x = jax.random.uniform(kx, (2, IN), jnp.float32)
    out = jax.block_until_ready(mlp_forward(x, *params))
    ref = _ref(x, w1, b1, w2, b2)
    assert out.shape == (2, OUT)
    # bf16 MXU inputs with f32 accumulation -> loose tolerance
    assert jnp.allclose(out, ref, atol=2e-2, rtol=2e-2), "mismatch vs reference (B=2)"

    # Secondary check: multi-step batch grid with a ragged last block
    # (B=1034 -> tile_b=520, grid=2, last block partially out of bounds).
    xb = jax.random.uniform(jax.random.PRNGKey(1), (1034, IN), jnp.float32)
    outb = jax.block_until_ready(mlp_forward(xb, *params))
    refb = _ref(xb, w1, b1, w2, b2)
    assert outb.shape == (1034, OUT)
    assert jnp.allclose(outb, refb, atol=2e-2, rtol=2e-2), "mismatch vs reference (B=1034)"

    print("KERNEL_OK")
</pallas_src>

<mosaic_0001>
module attributes {stable_mosaic.version = 11 : i64} {
  func.func @mlp_kernel(%arg0: i32, %arg1: memref<2x20xf32, #tpu.memory_space<vmem>>, %arg2: memref<128x256xbf16, #tpu.memory_space<vmem>>, %arg3: memref<1x256xf32, #tpu.memory_space<vmem>>, %arg4: memref<256x128xbf16, #tpu.memory_space<vmem>>, %arg5: memref<1x10xf32, #tpu.memory_space<vmem>>, %arg6: memref<2x10xf32, #tpu.memory_space<vmem>>, %arg7: memref<2x128xf32, #tpu.memory_space<vmem>>) attributes {dimension_semantics = [#tpu.dimension_semantics<parallel>], iteration_bounds = array<i64: 1>, scalar_prefetch = 0 : i64, scratch_operands = 1 : i64, tpu.core_type = #tpu.core_type<tc>, window_params = [{transform_indices = @transform_0, window_bounds = array<i64: 2, 20>}, {pipeline_mode = #tpu.pipeline_mode<synchronous>, transform_indices = @transform_1, window_bounds = array<i64: 128, 256>}, {pipeline_mode = #tpu.pipeline_mode<synchronous>, transform_indices = @transform_2, window_bounds = array<i64: 1, 256>}, {pipeline_mode = #tpu.pipeline_mode<synchronous>, transform_indices = @transform_3, window_bounds = array<i64: 256, 128>}, {pipeline_mode = #tpu.pipeline_mode<synchronous>, transform_indices = @transform_4, window_bounds = array<i64: 1, 10>}, {transform_indices = @transform_5, window_bounds = array<i64: 2, 10>}]} {
    %cst = arith.constant 0.000000e+00 : f32
    %0 = vector.broadcast %cst : f32 to vector<2x128xf32>
    %c0 = arith.constant 0 : index
    %c0_0 = arith.constant 0 : index
    %1 = vector.load %arg7[%c0, %c0_0] : memref<2x128xf32, #tpu.memory_space<vmem>>, vector<2x128xf32>
    tpu.vector_store %arg7[%c0, %c0_0], %0 {strides = array<i32>} : memref<2x128xf32, #tpu.memory_space<vmem>>, vector<2x128xf32>,
    %c0_1 = arith.constant 0 : index
    %c0_2 = arith.constant 0 : index
    %2 = vector.load %arg1[%c0_1, %c0_2] : memref<2x20xf32, #tpu.memory_space<vmem>>, vector<2x20xf32>
    %c0_3 = arith.constant 0 : index
    %c0_4 = arith.constant 0 : index
    %3 = vector.load %arg7[%c0_3, %c0_4] : memref<2x128xf32, #tpu.memory_space<vmem>>, vector<2x20xf32>
    tpu.vector_store %arg7[%c0_3, %c0_4], %2 {strides = array<i32>} : memref<2x128xf32, #tpu.memory_space<vmem>>, vector<2x20xf32>,
    %c0_5 = arith.constant 0 : index
    %c0_6 = arith.constant 0 : index
    %4 = vector.load %arg7[%c0_5, %c0_6] : memref<2x128xf32, #tpu.memory_space<vmem>>, vector<2x128xf32>
    %5 = arith.truncf %4 : vector<2x128xf32> to vector<2x128xbf16>
    %c0_7 = arith.constant 0 : index
    %c0_8 = arith.constant 0 : index
    %6 = vector.load %arg2[%c0_7, %c0_8] : memref<128x256xbf16, #tpu.memory_space<vmem>>, vector<128x256xbf16>
    %cst_9 = arith.constant dense<0.000000e+00> : vector<2x256xf32>
    %7 = tpu.matmul %5, %6, %cst_9 {dimension_numbers = #tpu.dot_dimension_numbers<[1], [0], [0], [1], [0, 0, 1, 1], [], []>} : vector<2x128xbf16>, vector<128x256xbf16>, vector<2x256xf32> -> vector<2x256xf32>
    %c0_10 = arith.constant 0 : index
    %c0_11 = arith.constant 0 : index
    %8 = vector.load %arg3[%c0_10, %c0_11] : memref<1x256xf32, #tpu.memory_space<vmem>>, vector<1x256xf32>
    %9 = vector.broadcast %8 : vector<1x256xf32> to vector<2x256xf32>
    %10 = arith.addf %7, %9 : vector<2x256xf32>
    %cst_12 = arith.constant 0.000000e+00 : f32
    %11 = vector.broadcast %cst_12 : f32 to vector<2x256xf32>
    %12 = arith.maximumf %10, %11 : vector<2x256xf32>
    %13 = arith.truncf %12 : vector<2x256xf32> to vector<2x256xbf16>
    %c0_13 = arith.constant 0 : index
    %c0_14 = arith.constant 0 : index
    %14 = vector.load %arg4[%c0_13, %c0_14] : memref<256x128xbf16, #tpu.memory_space<vmem>>, vector<256x128xbf16>
    %cst_15 = arith.constant dense<0.000000e+00> : vector<2x128xf32>
    %15 = tpu.matmul %13, %14, %cst_15 {dimension_numbers = #tpu.dot_dimension_numbers<[1], [0], [0], [1], [0, 0, 1, 1], [], []>} : vector<2x256xbf16>, vector<256x128xbf16>, vector<2x128xf32> -> vector<2x128xf32>
    %16 = vector.extract_strided_slice %15 {offsets = [0, 0], sizes = [2, 10], strides = [1, 1]} : vector<2x128xf32> to vector<2x10xf32>
    %c0_16 = arith.constant 0 : index
    %c0_17 = arith.constant 0 : index
    %17 = vector.load %arg5[%c0_16, %c0_17] : memref<1x10xf32, #tpu.memory_space<vmem>>, vector<1x10xf32>
    %18 = vector.broadcast %17 : vector<1x10xf32> to vector<2x10xf32>
    %19 = arith.addf %16, %18 : vector<2x10xf32>
    %c0_18 = arith.constant 0 : index
    %c0_19 = arith.constant 0 : index
    %20 = vector.load %arg6[%c0_18, %c0_19] : memref<2x10xf32, #tpu.memory_space<vmem>>, vector<2x10xf32>
    tpu.vector_store %arg6[%c0_18, %c0_19], %19 {strides = array<i32>} : memref<2x10xf32, #tpu.memory_space<vmem>>, vector<2x10xf32>,
    return
  }
  func.func @transform_0(%arg0: i32) -> (i32, i32) {
    %c0_i32 = arith.constant 0 : i32
    %c0_i32_0 = arith.constant 0 : i32
    return %arg0, %c0_i32 : i32, i32
  }
  func.func @transform_1(%arg0: i32) -> (i32, i32) {
    %c0_i32 = arith.constant 0 : i32
    %c0_i32_0 = arith.constant 0 : i32
    %c0_i32_1 = arith.constant 0 : i32
    return %c0_i32, %c0_i32_0 : i32, i32
  }
  func.func @transform_2(%arg0: i32) -> (i32, i32) {
    %c0_i32 = arith.constant 0 : i32
    %c0_i32_0 = arith.constant 0 : i32
    %c0_i32_1 = arith.constant 0 : i32
    return %c0_i32, %c0_i32_0 : i32, i32
  }
  func.func @transform_3(%arg0: i32) -> (i32, i32) {
    %c0_i32 = arith.constant 0 : i32
    %c0_i32_0 = arith.constant 0 : i32
    %c0_i32_1 = arith.constant 0 : i32
    return %c0_i32, %c0_i32_0 : i32, i32
  }
  func.func @transform_4(%arg0: i32) -> (i32, i32) {
    %c0_i32 = arith.constant 0 : i32
    %c0_i32_0 = arith.constant 0 : i32
    %c0_i32_1 = arith.constant 0 : i32
    return %c0_i32, %c0_i32_0 : i32, i32
  }
  func.func @transform_5(%arg0: i32) -> (i32, i32) {
    %c0_i32 = arith.constant 0 : i32
    %c0_i32_0 = arith.constant 0 : i32
    return %arg0, %c0_i32 : i32, i32
  }
}

</mosaic_0001>

<llo_original>
// kernel: mlp_forward.1
$region0: #{mlp_forward.1}
  #allocation0 [shape = 'u32[]', space=smem, size = 0x4, offset = 0x4, fixed_abs, tag = 'smem constant byte address 0x4 - core index']
  #allocation1 [shape = 'u32[144,128]{1,0:T(1,128)}', space=vmem, size = 0x12000, scoped, tag = 'internal scratch']
  #allocation2 [shape = 'f32[2,128]{1,0:T(2,128)}', space=vmem, size = 0x400, scoped, tag = 'scratch operand']
  %s0 = inlined_call_operand.hbm [shape: f32[2,20], index: 0, kind: input, shape index: {}]
  %s1 = inlined_call_operand.hbm [shape: bf16[128,256], index: 1, kind: input, shape index: {}]
  %s2 = inlined_call_operand.vmem [shape: f32[1,256], index: 2, kind: input, shape index: {}]
  %s3 = inlined_call_operand.hbm [shape: bf16[256,128], index: 3, kind: input, shape index: {}]
  %s4 = inlined_call_operand.vmem [shape: f32[1,10], index: 4, kind: input, shape index: {}]
  %s5 = inlined_call_operand.hbm [shape: f32[2,10], index: 5, kind: output, shape index: {}]
  %s6 = sld [smem:[#allocation0]]
  $region42: #{mlp_forward.1} parent=0
    _
  %s8 = ssub.s32 1, %s6
  %s9 = scalar_select 0, %s8, %s6
  $region1: #{mlp_forward.1} parent=0
    #allocation3 [shape = 'u8[1024]{0}', space=vmem, size = 0x400, scoped, tag = 'input window, operand 0, single buffered']
    #allocation4 [shape = 's32[1]{0}', space=sflag, size = 0x4, scoped, tag = 'scoped memory for mlp_forward.1']
    #allocation5 [shape = 's32[1]{0}', space=sflag, size = 0x4, scoped, tag = 'scoped memory for mlp_forward.1']
    #allocation6 [shape = 'u8[65536]{0}', space=vmem, size = 0x10000, scoped, tag = 'input window, operand 1, single buffered']
    #allocation7 [shape = 's32[1]{0}', space=sflag, size = 0x4, scoped, tag = 'scoped memory for mlp_forward.1']
    #allocation8 [shape = 'u8[65536]{0}', space=vmem, size = 0x10000, scoped, tag = 'input window, operand 3, single buffered']
    #allocation9 [shape = 'u8[1024]{0}', space=vmem, size = 0x400, scoped, tag = 'output window, operand 0, single buffered']
    %10 = vsyncpa [#allocation4], 0
    %11 = vsyncpa [#allocation7], 0
    %12 = vsyncpa [#allocation5], 0
    // Predicated region
    $region2: #{mlp_forward.1} parent=1 // pred_check
      _
    $region3: #{mlp_forward.1} parent=1 // pred_check_branch
      %14 = sbr.rel (0) target = $region5
    $region4: #{mlp_forward.1} parent=1 // pred_region
      %s16 = ssub.s32 32, 32
      %17 = vsyncadd [#allocation4], %s16
      %s19 = sshll.u32 [#allocation3], 4
      %s20 = int_to_ptr.vmem [resolvable:$true] %s19
      %22 = dma.hbm_to_vmem [thread:$0]  %s0, 32, %s20, [#allocation4]
    $region5: #{mlp_forward.1} parent=1 // pred_fallthru
      _
    // Predicated region
    $region6: #{mlp_forward.1} parent=1 // pred_check
      _
    $region7: #{mlp_forward.1} parent=1 // pred_check_branch
      %24 = sbr.rel (0) target = $region9
    $region8: #{mlp_forward.1} parent=1 // pred_region
      %s26 = ssub.s32 2048, 2048
      %27 = vsyncadd [#allocation7], %s26
      %s28 = sshll.u32 [#allocation6], 4
      %s29 = int_to_ptr.vmem [resolvable:$true] %s28
      %34 = dma.hbm_to_vmem [thread:$0]  %s1, 2048, %s29, [#allocation7], 128, 128, 8
    $region9: #{mlp_forward.1} parent=1 // pred_fallthru
      _
    // Predicated region
    $region10: #{mlp_forward.1} parent=1 // pred_check
      _
    $region11: #{mlp_forward.1} parent=1 // pred_check_branch
      %36 = sbr.rel (0) target = $region13
    $region12: #{mlp_forward.1} parent=1 // pred_region
      _
    $region13: #{mlp_forward.1} parent=1 // pred_fallthru
      _
    // Predicated region
    $region14: #{mlp_forward.1} parent=1 // pred_check
      _
    $region15: #{mlp_forward.1} parent=1 // pred_check_branch
      %38 = sbr.rel (0) target = $region17
    $region16: #{mlp_forward.1} parent=1 // pred_region
      %s40 = ssub.s32 2048, 2048
      %41 = vsyncadd [#allocation7], %s40
      %s42 = sshll.u32 [#allocation8], 4
      %s43 = int_to_ptr.vmem [resolvable:$true] %s42
      %48 = dma.hbm_to_vmem [thread:$0]  %s3, 2048, %s43, [#allocation7], 64, 64, 4
    $region17: #{mlp_forward.1} parent=1 // pred_fallthru
      _
    // Predicated region
    $region18: #{mlp_forward.1} parent=1 // pred_check
      _
    $region19: #{mlp_forward.1} parent=1 // pred_check_branch
      %50 = sbr.rel (0) target = $region21
    $region20: #{mlp_forward.1} parent=1 // pred_region
      _
    $region21: #{mlp_forward.1} parent=1 // pred_fallthru
      _
    // Predicated region
    $region22: #{mlp_forward.1} parent=1 // pred_check
      _
    $region23: #{mlp_forward.1} parent=1 // pred_check_branch
      %52 = sbr.rel (0) target = $region25
    $region24: #{mlp_forward.1} parent=1 // pred_region
      %53 = dma.done [#allocation4], 32
    $region25: #{mlp_forward.1} parent=1 // pred_fallthru
      _
    // Predicated region
    $region26: #{mlp_forward.1} parent=1 // pred_check
      _
    $region27: #{mlp_forward.1} parent=1 // pred_check_branch
      %55 = sbr.rel (0) target = $region29
    $region28: #{mlp_forward.1} parent=1 // pred_region
      %56 = dma.done [#allocation7], 2048
    $region29: #{mlp_forward.1} parent=1 // pred_fallthru
      _
    // Predicated region
    $region30: #{mlp_forward.1} parent=1 // pred_check
      _
    $region31: #{mlp_forward.1} parent=1 // pred_check_branch
      %58 = sbr.rel (0) target = $region33
    $region32: #{mlp_forward.1} parent=1 // pred_region
      %59 = dma.done [#allocation7], 2048
    $region33: #{mlp_forward.1} parent=1 // pred_fallthru
      _
    %61 = vst [vmem:[#allocation2] sm:$0x3] 0.0
    %v62 = vld [vmem:[#allocation3] sm:$0x3]
    %vm63 = vcmask 156672
    %64 = vst.msk [vmem:[#allocation2] sm:$0x3] %vm63, %v62
    %v65 = vld [vmem:[#allocation2] sm:$0x3]
    %v66 = vpack.c.bf16 %v65, %v65
    %v67 = vld [vmem:[#allocation6] sm:$0xff]
    %v68 = vld [vmem:[#allocation6 + $0x8] sm:$0xff]
    %v69 = vld [vmem:[#allocation6 + $0x10] sm:$0xff]
    %v70 = vld [vmem:[#allocation6 + $0x18] sm:$0xff]
    %v71 = vld [vmem:[#allocation6 + $0x20] sm:$0xff]
    %v72 = vld [vmem:[#allocation6 + $0x28] sm:$0xff]
    %v73 = vld [vmem:[#allocation6 + $0x30] sm:$0xff]
    %v74 = vld [vmem:[#allocation6 + $0x38] sm:$0xff]
    %v75 = vld [vmem:[#allocation6 + $0x40] sm:$0xff]
    %v76 = vld [vmem:[#allocation6 + $0x48] sm:$0xff]
    %v77 = vld [vmem:[#allocation6 + $0x50] sm:$0xff]
    %v78 = vld [vmem:[#allocation6 + $0x58] sm:$0xff]
    %v79 = vld [vmem:[#allocation6 + $0x60] sm:$0xff]
    %v80 = vld [vmem:[#allocation6 + $0x68] sm:$0xff]
    %v81 = vld [vmem:[#allocation6 + $0x70] sm:$0xff]
    %v82 = vld [vmem:[#allocation6 + $0x78] sm:$0xff]
    %v83 = vld [vmem:[%s2] sm:$0x3]
    %v85 = vlaneseq
    %v86 = vshrl.u32 %v85, 7
    %v87 = vsub.s32 0, %v86
    %v88 = vrot.slane %v83, %v87
    %v89 = vlaneseq
    %v90 = vshrl.u32 %v89, 7
    %v91 = vsub.s32 1, %v90
    %v92 = vrot.slane %v83, %v91
    %v111 = vunpack.c.l.b16 %v67
    %v112 = vunpack.c.h.b16 %v67
    %v113 = vunpack.c.l.b16 %v68
    %v114 = vunpack.c.h.b16 %v68
    %v115 = vunpack.c.l.b16 %v69
    %v116 = vunpack.c.h.b16 %v69
    %v117 = vunpack.c.l.b16 %v70
    %v118 = vunpack.c.h.b16 %v70
    %v119 = vunpack.c.l.b16 %v71
    %v120 = vunpack.c.h.b16 %v71
    %v121 = vunpack.c.l.b16 %v72
    %v122 = vunpack.c.h.b16 %v72
    %v123 = vunpack.c.l.b16 %v73
    %v124 = vunpack.c.h.b16 %v73
    %v125 = vunpack.c.l.b16 %v74
    %v126 = vunpack.c.h.b16 %v74
    %v127 = vunpack.c.l.b16 %v75
    %v128 = vunpack.c.h.b16 %v75
    %v129 = vunpack.c.l.b16 %v76
    %v130 = vunpack.c.h.b16 %v76
    %v131 = vunpack.c.l.b16 %v77
    %v132 = vunpack.c.h.b16 %v77
    %v133 = vunpack.c.l.b16 %v78
    %v134 = vunpack.c.h.b16 %v78
    %v135 = vunpack.c.l.b16 %v79
    %v136 = vunpack.c.h.b16 %v79
    %v137 = vunpack.c.l.b16 %v80
    %v138 = vunpack.c.h.b16 %v80
    %v139 = vunpack.c.l.b16 %v81
    %v140 = vunpack.c.h.b16 %v81
    %v141 = vunpack.c.l.b16 %v82
    %v142 = vunpack.c.h.b16 %v82
    %v143 = vpack.c.b16 %v113, %v111
    %v144 = vpack.c.b16 %v114, %v112
    %v145 = vpack.c.b16 %v117, %v115
    %v146 = vpack.c.b16 %v118, %v116
    %v147 = vpack.c.b16 %v121, %v119
    %v148 = vpack.c.b16 %v122, %v120
    %v149 = vpack.c.b16 %v125, %v123
    %v150 = vpack.c.b16 %v126, %v124
    %v151 = vpack.c.b16 %v129, %v127
    %v152 = vpack.c.b16 %v130, %v128
    %v153 = vpack.c.b16 %v133, %v131
    %v154 = vpack.c.b16 %v134, %v132
    %v155 = vpack.c.b16 %v137, %v135
    %v156 = vpack.c.b16 %v138, %v136
    %v157 = vpack.c.b16 %v141, %v139
    %v158 = vpack.c.b16 %v142, %v140
    %175 = vmatprep.subr.bf16.mxu0 %v158
    %176 = vmatpush1.bf16.msra.mxu0 %v157
    %177 = vmatprep.subr.bf16.mxu0 %v156
    %178 = vmatpush1.bf16.msra.mxu0 %v155
    %179 = vmatprep.subr.bf16.mxu0 %v154
    %180 = vmatpush1.bf16.msra.mxu0 %v153
    %181 = vmatprep.subr.bf16.mxu0 %v152
    %182 = vmatpush1.bf16.msra.mxu0 %v151
    %183 = vmatprep.subr.bf16.mxu0 %v150
    %184 = vmatpush1.bf16.msra.mxu0 %v149
    %185 = vmatprep.subr.bf16.mxu0 %v148
    %186 = vmatpush1.bf16.msra.mxu0 %v147
    %187 = vmatprep.subr.bf16.mxu0 %v146
    %188 = vmatpush1.bf16.msra.mxu0 %v145
    %189 = vmatprep.subr.bf16.mxu0 %v144
    %190 = vmatpush1.bf16.msra.mxu0 %v143
    %191 = vmatprep.subr.bf16.mxu0 0
    %192 = vmatpush2.bf16.msra.mxu0 0
    %193 = vmatprep.subr.bf16.mxu0 0
    %194 = vmatpush2.bf16.msra.mxu0 0
    %195 = vmatprep.subr.bf16.mxu0 0
    %196 = vmatpush2.bf16.msra.mxu0 0
    %197 = vmatprep.subr.bf16.mxu0 0
    %198 = vmatpush2.bf16.msra.mxu0 0
    %199 = vmatprep.subr.bf16.mxu0 0
    %200 = vmatpush2.bf16.msra.mxu0 0
    %201 = vmatprep.subr.bf16.mxu0 0
    %202 = vmatpush2.bf16.msra.mxu0 0
    %203 = vmatprep.subr.bf16.mxu0 0
    %204 = vmatpush2.bf16.msra.mxu0 0
    %205 = vmatprep.subr.bf16.mxu0 0
    %206 = vmatpush2.bf16.msra.mxu0 0
    %207 = vmatprep.mubr.bf16.mxu0 0
    %208 = vmatmul.mubr.bf16.gmra.mxu0 %v66
    %v209 = vpop.f32.mrf.mxu0
    %v210 = vadd.f32 %v88, %v209
    %v211 = vpop.f32.mrf.mxu0
    %v212 = vadd.f32 %v92, %v211
    %v213 = vpop.f32.mrf.mxu0
    %v214 = vpop.f32.mrf.mxu0
    %215 = vdwg.mxu0
    %v216 = vmax.f32 %v210, 0.0
    %v217 = vmax.f32 %v212, 0.0
    %v218 = vpack.c.bf16 %v216, %v216
    %v219 = vpack.c.bf16 %v217, %v217
    %v220 = vld [vmem:[#allocation8] sm:$0xf]
    %v221 = vld [vmem:[#allocation8 + $0x4] sm:$0xf]
    %v222 = vld [vmem:[#allocation8 + $0x8] sm:$0xf]
    %v223 = vld [vmem:[#allocation8 + $0xc] sm:$0xf]
    %v224 = vld [vmem:[#allocation8 + $0x10] sm:$0xf]
    %v225 = vld [vmem:[#allocation8 + $0x14] sm:$0xf]
    %v226 = vld [vmem:[#allocation8 + $0x18] sm:$0xf]
    %v227 = vld [vmem:[#allocation8 + $0x1c] sm:$0xf]
    %v228 = vld [vmem:[#allocation8 + $0x20] sm:$0xf]
    %v229 = vld [vmem:[#allocation8 + $0x24] sm:$0xf]
    %v230 = vld [vmem:[#allocation8 + $0x28] sm:$0xf]
    %v231 = vld [vmem:[#allocation8 + $0x2c] sm:$0xf]
    %v232 = vld [vmem:[#allocation8 + $0x30] sm:$0xf]
    %v233 = vld [vmem:[#allocation8 + $0x34] sm:$0xf]
    %v234 = vld [vmem:[#allocation8 + $0x38] sm:$0xf]
    %v235 = vld [vmem:[#allocation8 + $0x3c] sm:$0xf]
    %v236 = vld [vmem:[#allocation8 + $0x40] sm:$0xf]
    %v237 = vld [vmem:[#allocation8 + $0x44] sm:$0xf]
    %v238 = vld [vmem:[#allocation8 + $0x48] sm:$0xf]
    %v239 = vld [vmem:[#allocation8 + $0x4c] sm:$0xf]
    %v240 = vld [vmem:[#allocation8 + $0x50] sm:$0xf]
    %v241 = vld [vmem:[#allocation8 + $0x54] sm:$0xf]
    %v242 = vld [vmem:[#allocation8 + $0x58] sm:$0xf]
    %v243 = vld [vmem:[#allocation8 + $0x5c] sm:$0xf]
    %v244 = vld [vmem:[#allocation8 + $0x60] sm:$0xf]
    %v245 = vld [vmem:[#allocation8 + $0x64] sm:$0xf]
    %v246 = vld [vmem:[#allocation8 + $0x68] sm:$0xf]
    %v247 = vld [vmem:[#allocation8 + $0x6c] sm:$0xf]
    %v248 = vld [vmem:[#allocation8 + $0x70] sm:$0xf]
    %v249 = vld [vmem:[#allocation8 + $0x74] sm:$0xf]
    %v250 = vld [vmem:[#allocation8 + $0x78] sm:$0xf]
    %v251 = vld [vmem:[#allocation8 + $0x7c] sm:$0xf]
    %v284 = vunpack.c.l.b16 %v220
    %v285 = vunpack.c.l.b16 %v221
    %v286 = vunpack.c.l.b16 %v222
    %v287 = vunpack.c.l.b16 %v223
    %v288 = vunpack.c.l.b16 %v224
    %v289 = vunpack.c.l.b16 %v225
    %v290 = vunpack.c.l.b16 %v226
    %v291 = vunpack.c.l.b16 %v227
    %v292 = vunpack.c.l.b16 %v228
    %v293 = vunpack.c.l.b16 %v229
    %v294 = vunpack.c.l.b16 %v230
    %v295 = vunpack.c.l.b16 %v231
    %v296 = vunpack.c.l.b16 %v232
    %v297 = vunpack.c.l.b16 %v233
    %v298 = vunpack.c.l.b16 %v234
    %v299 = vunpack.c.l.b16 %v235
    %v300 = vunpack.c.l.b16 %v236
    %v301 = vunpack.c.l.b16 %v237
    %v302 = vunpack.c.l.b16 %v238
    %v303 = vunpack.c.l.b16 %v239
    %v304 = vunpack.c.l.b16 %v240
    %v305 = vunpack.c.l.b16 %v241
    %v306 = vunpack.c.l.b16 %v242
    %v307 = vunpack.c.l.b16 %v243
    %v308 = vunpack.c.l.b16 %v244
    %v309 = vunpack.c.l.b16 %v245
    %v310 = vunpack.c.l.b16 %v246
    %v311 = vunpack.c.l.b16 %v247
    %v312 = vunpack.c.l.b16 %v248
    %v313 = vunpack.c.l.b16 %v249
    %v314 = vunpack.c.l.b16 %v250
    %v315 = vunpack.c.l.b16 %v251
    %v316 = vpack.c.b16 %v285, %v284
    %v317 = vpack.c.b16 %v287, %v286
    %v318 = vpack.c.b16 %v289, %v288
    %v319 = vpack.c.b16 %v291, %v290
    %v320 = vpack.c.b16 %v293, %v292
    %v321 = vpack.c.b16 %v295, %v294
    %v322 = vpack.c.b16 %v297, %v296
    %v323 = vpack.c.b16 %v299, %v298
    %v324 = vpack.c.b16 %v301, %v300
    %v325 = vpack.c.b16 %v303, %v302
    %v326 = vpack.c.b16 %v305, %v304
    %v327 = vpack.c.b16 %v307, %v306
    %v328 = vpack.c.b16 %v309, %v308
    %v329 = vpack.c.b16 %v311, %v310
    %v330 = vpack.c.b16 %v313, %v312
    %v331 = vpack.c.b16 %v315, %v314
    %348 = vmatprep.subr.bf16.mxu0 0
    %349 = vmatpush1.bf16.msra.mxu0 %v323
    %350 = vmatprep.subr.bf16.mxu0 0
    %351 = vmatpush1.bf16.msra.mxu0 %v322
    %352 = vmatprep.subr.bf16.mxu0 0
    %353 = vmatpush1.bf16.msra.mxu0 %v321
    %354 = vmatprep.subr.bf16.mxu0 0
    %355 = vmatpush1.bf16.msra.mxu0 %v320
    %356 = vmatprep.subr.bf16.mxu0 0
    %357 = vmatpush1.bf16.msra.mxu0 %v319
    %358 = vmatprep.subr.bf16.mxu0 0
    %359 = vmatpush1.bf16.msra.mxu0 %v318
    %360 = vmatprep.subr.bf16.mxu0 0
    %361 = vmatpush1.bf16.msra.mxu0 %v317
    %362 = vmatprep.subr.bf16.mxu0 0
    %363 = vmatpush1.bf16.msra.mxu0 %v316
    %364 = vmatprep.subr.bf16.mxu0 0
    %365 = vmatpush2.bf16.msra.mxu0 %v331
    %366 = vmatprep.subr.bf16.mxu0 0
    %367 = vmatpush2.bf16.msra.mxu0 %v330
    %368 = vmatprep.subr.bf16.mxu0 0
    %369 = vmatpush2.bf16.msra.mxu0 %v329
    %370 = vmatprep.subr.bf16.mxu0 0
    %371 = vmatpush2.bf16.msra.mxu0 %v328
    %372 = vmatprep.subr.bf16.mxu0 0
    %373 = vmatpush2.bf16.msra.mxu0 %v327
    %374 = vmatprep.subr.bf16.mxu0 0
    %375 = vmatpush2.bf16.msra.mxu0 %v326
    %376 = vmatprep.subr.bf16.mxu0 0
    %377 = vmatpush2.bf16.msra.mxu0 %v325
    %378 = vmatprep.subr.bf16.mxu0 0
    %379 = vmatpush2.bf16.msra.mxu0 %v324
    %380 = vmatprep.mubr.bf16.mxu0 %v219
    %381 = vmatmul.mubr.bf16.gmra.mxu0 %v218
    %v382 = vpop.f32.mrf.mxu0
    %v383 = vadd.f32 0.0, %v382
    %v384 = vpop.f32.mrf.mxu0
    %v385 = vpop.f32.mrf.mxu0
    %v386 = vpop.f32.mrf.mxu0
    %387 = vdwg.mxu0
    %v388 = vld [vmem:[%s4] sm:$0x1]
    %v390 = vlaneseq
    %v391 = vshrl.u32 %v390, 7
    %v392 = vsub.s32 0, %v391
    %v393 = vrot.slane %v388, %v392
    %v395 = vadd.f32 %v383, %v393
    %vm396 = vcmask 74752
    %397 = vst.msk [vmem:[#allocation9] sm:$0x3] %vm396, %v395
    // Predicated region
    $region34: #{mlp_forward.1} parent=1 // pred_check
      _
    $region35: #{mlp_forward.1} parent=1 // pred_check_branch
      %399 = sbr.rel (0) target = $region37
    $region36: #{mlp_forward.1} parent=1 // pred_region
      %s401 = ssub.s32 32, 32
      %402 = vsyncadd [#allocation5], %s401
      %s404 = sshll.u32 [#allocation9], 4
      %s405 = int_to_ptr.vmem [resolvable:$true] %s404
      %407 = dma.vmem_to_hbm [thread:$0]  %s405, 32, %s5, [#allocation5]
    $region37: #{mlp_forward.1} parent=1 // pred_fallthru
      _
    // Predicated region
    $region38: #{mlp_forward.1} parent=1 // pred_check
      _
    $region39: #{mlp_forward.1} parent=1 // pred_check_branch
      %409 = sbr.rel (0) target = $region41
    $region40: #{mlp_forward.1} parent=1 // pred_region
      %410 = dma.done [#allocation5], 32
    $region41: #{mlp_forward.1} parent=1 // pred_fallthru
      _
    %411 = vsyncpa [#allocation4], 1
    %412 = vsyncpa [#allocation7], 1
    %413 = vsyncpa [#allocation5], 1

</llo_original>
